<compile_context>
chip_gen: v7x
topology: tpu7x:2x2x1
jax: 0.10.0
libtpu: 0.0.40
codegen_flags: <defaults>
</compile_context>

<pallas_src>
import jax
import jax.numpy as jnp
from jax.experimental import pallas as pl
from jax.experimental.pallas import tpu as pltpu


def _mlp_kernel(xT_ref, w1_ref, b1_ref, w2_ref, b2_ref, o_ref):
    # xT: (6, TB)    w1: (100, 6)   b1: (100, 1)
    # w2: (1, 100)   b2: (1, 1) in SMEM        o: (1, TB)
    xt = xT_ref[...]
    # fc1 on the MXU: (100, 6) @ (6, TB) -> (100, TB); bias + ReLU on the VPU.
    h = jnp.dot(w1_ref[...], xt, preferred_element_type=jnp.float32)
    h = jnp.maximum(h + b1_ref[...], 0.0)
    # fc2: (1, 100) @ (100, TB) -> (1, TB); batch stays the lane dimension.
    y = jnp.dot(w2_ref[...], h, preferred_element_type=jnp.float32)
    o_ref[...] = (y + b2_ref[0, 0]).astype(o_ref.dtype)


def net_forward(x, w1, b1, w2, b2, *, tile_b=2048):
    """Forward pass of Net.

    x:  (B, 6) float32
    w1: (100, 6), b1: (100,)   -- PyTorch fc1 layout
    w2: (1, 100), b2: (1,)     -- PyTorch fc2 layout
    Returns (B, 1) float32.
    """
    B, F = x.shape

    # Tile size: a multiple of 128 (lane width), capped at tile_b.
    tile_b = max(128, (int(tile_b) // 128) * 128)
    tb = min(tile_b, pl.cdiv(B, 128) * 128)
    b_pad = pl.cdiv(B, tb) * tb
    grid = (b_pad // tb,)

    # Feature-major + zero-pad the ragged tail; padded columns compute junk
    # that is sliced off below (never stored out of bounds).
    xT = jnp.zeros((F, b_pad), jnp.float32).at[:, :B].set(x.T.astype(jnp.float32))

    b1c = b1.reshape(w1.shape[0], 1).astype(jnp.float32)  # (100, 1), resident
    b2s = b2.reshape(1, 1).astype(jnp.float32)            # (1, 1), SMEM scalar

    out = pl.pallas_call(
        _mlp_kernel,
        out_shape=jax.ShapeDtypeStruct((1, b_pad), jnp.float32),
        grid=grid,
        in_specs=[
            pl.BlockSpec((F, tb), lambda i: (0, i)),            # xT batch tile
            pl.BlockSpec(w1.shape, lambda i: (0, 0)),           # resident
            pl.BlockSpec(b1c.shape, lambda i: (0, 0)),          # resident
            pl.BlockSpec(w2.shape, lambda i: (0, 0)),           # resident
            pl.BlockSpec(memory_space=pltpu.MemorySpace.SMEM),  # scalar b2
        ],
        out_specs=pl.BlockSpec((1, tb), lambda i: (0, i)),      # lane-dense
        compiler_params=pltpu.CompilerParams(
            dimension_semantics=("parallel",),
            vmem_limit_bytes=32 * 1024 * 1024,
        ),
    )(xT, w1, b1c, w2, b2s)

    return out[0, :B].reshape(B, 1)


def init_params(key):
    """PyTorch-layout params: fc1 (100,6)/(100,), fc2 (1,100)/(1,).

    Uses uniform(-1/sqrt(fan_in), 1/sqrt(fan_in)) like torch's default init.
    """
    k1, k2, k3, k4 = jax.random.split(key, 4)
    bound1 = 1.0 / jnp.sqrt(6.0)
    bound2 = 1.0 / jnp.sqrt(100.0)
    w1 = jax.random.uniform(k1, (100, 6), jnp.float32, -bound1, bound1)
    b1 = jax.random.uniform(k2, (100,), jnp.float32, -bound1, bound1)
    w2 = jax.random.uniform(k3, (1, 100), jnp.float32, -bound2, bound2)
    b2 = jax.random.uniform(k4, (1,), jnp.float32, -bound2, bound2)
    return w1, b1, w2, b2


def _reference(x, w1, b1, w2, b2):
    # Same math as the PyTorch module (y = x @ W.T + b).
    return jnp.maximum(x @ w1.T + b1, 0.0) @ w2.T + b2


if __name__ == "__main__":
    key = jax.random.PRNGKey(0)
    k_params, k_x1, k_x2 = jax.random.split(key, 3)
    w1, b1, w2, b2 = init_params(k_params)

    # Small batch (exercises pad-to-128 single-tile path).
    x_small = jax.random.normal(k_x1, (8, 6), jnp.float32)
    y_small = net_forward(x_small, w1, b1, w2, b2)
    jax.block_until_ready(y_small)
    ref_small = _reference(x_small, w1, b1, w2, b2)
    assert y_small.shape == (8, 1)
    assert jnp.allclose(y_small, ref_small, atol=1e-5, rtol=1e-5)

    # Ragged multi-tile batch (grid of 3 tiles with tile_b=128).
    x_big = jax.random.normal(k_x2, (300, 6), jnp.float32)
    y_big = net_forward(x_big, w1, b1, w2, b2, tile_b=128)
    jax.block_until_ready(y_big)
    ref_big = _reference(x_big, w1, b1, w2, b2)
    assert y_big.shape == (300, 1)
    assert jnp.allclose(y_big, ref_big, atol=1e-5, rtol=1e-5)

    print("KERNEL_OK")
</pallas_src>

<mosaic_0001>
module attributes {stable_mosaic.version = 11 : i64} {
  func.func @_mlp_kernel(%arg0: i32, %arg1: memref<6x128xf32, #tpu.memory_space<vmem>>, %arg2: memref<100x6xf32, #tpu.memory_space<vmem>>, %arg3: memref<100x1xf32, #tpu.memory_space<vmem>>, %arg4: memref<1x100xf32, #tpu.memory_space<vmem>>, %arg5: memref<1x1xf32, #tpu.memory_space<smem>>, %arg6: memref<1x128xf32, #tpu.memory_space<vmem>>) attributes {dimension_semantics = [#tpu.dimension_semantics<parallel>], iteration_bounds = array<i64: 1>, scalar_prefetch = 0 : i64, scratch_operands = 0 : i64, tpu.core_type = #tpu.core_type<tc>, window_params = [{transform_indices = @transform_0, window_bounds = array<i64: 6, 128>}, {pipeline_mode = #tpu.pipeline_mode<synchronous>, transform_indices = @transform_1, window_bounds = array<i64: 100, 6>}, {pipeline_mode = #tpu.pipeline_mode<synchronous>, transform_indices = @transform_2, window_bounds = array<i64: 100, 1>}, {pipeline_mode = #tpu.pipeline_mode<synchronous>, transform_indices = @transform_3, window_bounds = array<i64: 1, 100>}, {transform_indices = @transform_4, window_bounds = array<i64: 1, 1>}, {transform_indices = @transform_5, window_bounds = array<i64: 1, 128>}]} {
    %c0 = arith.constant 0 : index
    %c0_0 = arith.constant 0 : index
    %0 = vector.load %arg1[%c0, %c0_0] : memref<6x128xf32, #tpu.memory_space<vmem>>, vector<6x128xf32>
    %c0_1 = arith.constant 0 : index
    %c0_2 = arith.constant 0 : index
    %1 = vector.load %arg2[%c0_1, %c0_2] : memref<100x6xf32, #tpu.memory_space<vmem>>, vector<100x6xf32>
    %cst = arith.constant dense<0.000000e+00> : vector<100x128xf32>
    %2 = tpu.matmul %1, %0, %cst {dimension_numbers = #tpu.dot_dimension_numbers<[1], [0], [0], [1], [0, 0, 1, 1], [], []>} : vector<100x6xf32>, vector<6x128xf32>, vector<100x128xf32> -> vector<100x128xf32>
    %c0_3 = arith.constant 0 : index
    %c0_4 = arith.constant 0 : index
    %3 = vector.load %arg3[%c0_3, %c0_4] : memref<100x1xf32, #tpu.memory_space<vmem>>, vector<100x1xf32>
    %4 = vector.broadcast %3 : vector<100x1xf32> to vector<100x128xf32>
    %5 = arith.addf %2, %4 : vector<100x128xf32>
    %cst_5 = arith.constant 0.000000e+00 : f32
    %6 = vector.broadcast %cst_5 : f32 to vector<100x128xf32>
    %7 = arith.maximumf %5, %6 : vector<100x128xf32>
    %c0_6 = arith.constant 0 : index
    %c0_7 = arith.constant 0 : index
    %8 = vector.load %arg4[%c0_6, %c0_7] : memref<1x100xf32, #tpu.memory_space<vmem>>, vector<1x100xf32>
    %cst_8 = arith.constant dense<0.000000e+00> : vector<1x128xf32>
    %9 = tpu.matmul %8, %7, %cst_8 {dimension_numbers = #tpu.dot_dimension_numbers<[1], [0], [0], [1], [0, 0, 1, 1], [], []>} : vector<1x100xf32>, vector<100x128xf32>, vector<1x128xf32> -> vector<1x128xf32>
    %c0_9 = arith.constant 0 : index
    %c0_10 = arith.constant 0 : index
    %10 = memref.load %arg5[%c0_9, %c0_10] : memref<1x1xf32, #tpu.memory_space<smem>>
    %11 = vector.broadcast %10 : f32 to vector<1x128xf32>
    %12 = arith.addf %9, %11 : vector<1x128xf32>
    %c0_11 = arith.constant 0 : index
    %c0_12 = arith.constant 0 : index
    %13 = vector.load %arg6[%c0_11, %c0_12] : memref<1x128xf32, #tpu.memory_space<vmem>>, vector<1x128xf32>
    tpu.vector_store %arg6[%c0_11, %c0_12], %12 {strides = array<i32>} : memref<1x128xf32, #tpu.memory_space<vmem>>, vector<1x128xf32>,
    return
  }
  func.func @transform_0(%arg0: i32) -> (i32, i32) {
    %c0_i32 = arith.constant 0 : i32
    %c0_i32_0 = arith.constant 0 : i32
    return %c0_i32, %arg0 : i32, i32
  }
  func.func @transform_1(%arg0: i32) -> (i32, i32) {
    %c0_i32 = arith.constant 0 : i32
    %c0_i32_0 = arith.constant 0 : i32
    %c0_i32_1 = arith.constant 0 : i32
    return %c0_i32, %c0_i32_0 : i32, i32
  }
  func.func @transform_2(%arg0: i32) -> (i32, i32) {
    %c0_i32 = arith.constant 0 : i32
    %c0_i32_0 = arith.constant 0 : i32
    %c0_i32_1 = arith.constant 0 : i32
    return %c0_i32, %c0_i32_0 : i32, i32
  }
  func.func @transform_3(%arg0: i32) -> (i32, i32) {
    %c0_i32 = arith.constant 0 : i32
    %c0_i32_0 = arith.constant 0 : i32
    %c0_i32_1 = arith.constant 0 : i32
    return %c0_i32, %c0_i32_0 : i32, i32
  }
  func.func @transform_4(%arg0: i32) -> (i32, i32) {
    %c0_i32 = arith.constant 0 : i32
    %c0_i32_0 = arith.constant 0 : i32
    %c0_i32_1 = arith.constant 0 : i32
    return %c0_i32, %c0_i32_0 : i32, i32
  }
  func.func @transform_5(%arg0: i32) -> (i32, i32) {
    %c0_i32 = arith.constant 0 : i32
    %c0_i32_0 = arith.constant 0 : i32
    return %c0_i32, %arg0 : i32, i32
  }
}

</mosaic_0001>

<llo_original>
// kernel: tpu_custom_call.1
$region0: #{tpu_custom_call.1}
  #allocation0 [shape = 'u32[]', space=smem, size = 0x4, offset = 0x4, fixed_abs, tag = 'smem constant byte address 0x4 - core index']
  #allocation1 [shape = 'u32[144,128]{1,0:T(1,128)}', space=vmem, size = 0x12000, scoped, tag = 'internal scratch']
  #allocation2 [shape = 'f32[1,1]{1,0:T(1,128)S(6)}', space=smem, size = 0x200, scoped, tag = 'scoped memory for tpu_custom_call.1']
  %s0 = inlined_call_operand.vmem [shape: f32[6,128], index: 0, kind: input, shape index: {}]
  %s1 = inlined_call_operand.vmem [shape: f32[100,6], index: 1, kind: input, shape index: {}]
  %s2 = inlined_call_operand.vmem [shape: f32[100,1], index: 2, kind: input, shape index: {}]
  %s3 = inlined_call_operand.vmem [shape: f32[1,100], index: 3, kind: input, shape index: {}]
  %s4 = inlined_call_operand.<no memory space> [shape: f32[1,1], index: 4, kind: input, shape index: {}]
  %s5 = inlined_call_operand.hbm [shape: f32[1,128], index: 5, kind: output, shape index: {}]
  %s6 = sld [smem:[#allocation0]]
  $region30: #{tpu_custom_call.1} parent=0
    _
  %s8 = ssub.s32 1, %s6
  %s9 = scalar_select 0, %s8, %s6
  %10 = sst [smem:[#allocation2]] %s4
  $region1: #{tpu_custom_call.1} parent=0
    #allocation3 [shape = 'u8[512]{0}', space=vmem, size = 0x400, scoped, tag = 'output window, operand 0, single buffered']
    #allocation4 [shape = 's32[1]{0}', space=sflag, size = 0x4, scoped, tag = 'scoped memory for tpu_custom_call.1']
    %11 = vsyncpa [#allocation4], 0
    // Predicated region
    $region2: #{tpu_custom_call.1} parent=1 // pred_check
      _
    $region3: #{tpu_custom_call.1} parent=1 // pred_check_branch
      %13 = sbr.rel (0) target = $region5
    $region4: #{tpu_custom_call.1} parent=1 // pred_region
      _
    $region5: #{tpu_custom_call.1} parent=1 // pred_fallthru
      _
    // Predicated region
    $region6: #{tpu_custom_call.1} parent=1 // pred_check
      _
    $region7: #{tpu_custom_call.1} parent=1 // pred_check_branch
      %15 = sbr.rel (0) target = $region9
    $region8: #{tpu_custom_call.1} parent=1 // pred_region
      _
    $region9: #{tpu_custom_call.1} parent=1 // pred_fallthru
      _
    // Predicated region
    $region10: #{tpu_custom_call.1} parent=1 // pred_check
      _
    $region11: #{tpu_custom_call.1} parent=1 // pred_check_branch
      %17 = sbr.rel (0) target = $region13
    $region12: #{tpu_custom_call.1} parent=1 // pred_region
      _
    $region13: #{tpu_custom_call.1} parent=1 // pred_fallthru
      _
    // Predicated region
    $region14: #{tpu_custom_call.1} parent=1 // pred_check
      _
    $region15: #{tpu_custom_call.1} parent=1 // pred_check_branch
      %19 = sbr.rel (0) target = $region17
    $region16: #{tpu_custom_call.1} parent=1 // pred_region
      _
    $region17: #{tpu_custom_call.1} parent=1 // pred_fallthru
      _
    // Predicated region
    $region18: #{tpu_custom_call.1} parent=1 // pred_check
      _
    $region19: #{tpu_custom_call.1} parent=1 // pred_check_branch
      %21 = sbr.rel (0) target = $region21
    $region20: #{tpu_custom_call.1} parent=1 // pred_region
      _
    $region21: #{tpu_custom_call.1} parent=1 // pred_fallthru
      _
    %v22 = vld [vmem:[%s0] sm:$0x3f]
    %v23 = vld [vmem:[%s1] sm:$0xff]
    %v24 = vld [vmem:[%s1 + $0x8] sm:$0xff]
    %v25 = vld [vmem:[%s1 + $0x10] sm:$0xff]
    %v26 = vld [vmem:[%s1 + $0x18] sm:$0xff]
    %v27 = vld [vmem:[%s1 + $0x20] sm:$0xff]
    %v28 = vld [vmem:[%s1 + $0x28] sm:$0xff]
    %v29 = vld [vmem:[%s1 + $0x30] sm:$0xff]
    %v30 = vld [vmem:[%s1 + $0x38] sm:$0xff]
    %v31 = vld [vmem:[%s1 + $0x40] sm:$0xff]
    %v32 = vld [vmem:[%s1 + $0x48] sm:$0xff]
    %v33 = vld [vmem:[%s1 + $0x50] sm:$0xff]
    %v34 = vld [vmem:[%s1 + $0x58] sm:$0xff]
    %v35 = vld [vmem:[%s1 + $0x60] sm:$0xf]
    %v36 = vld [vmem:[%s2] sm:$0xff]
    %v37 = vld [vmem:[%s2 + $0x8] sm:$0xff]
    %v38 = vld [vmem:[%s2 + $0x10] sm:$0xff]
    %v39 = vld [vmem:[%s2 + $0x18] sm:$0xff]
    %v40 = vld [vmem:[%s2 + $0x20] sm:$0xff]
    %v41 = vld [vmem:[%s2 + $0x28] sm:$0xff]
    %v42 = vld [vmem:[%s2 + $0x30] sm:$0xff]
    %v43 = vld [vmem:[%s2 + $0x38] sm:$0xff]
    %v44 = vld [vmem:[%s2 + $0x40] sm:$0xff]
    %v45 = vld [vmem:[%s2 + $0x48] sm:$0xff]
    %v46 = vld [vmem:[%s2 + $0x50] sm:$0xff]
    %v47 = vld [vmem:[%s2 + $0x58] sm:$0xff]
    %v48 = vld [vmem:[%s2 + $0x60] sm:$0xf]
    %50 = vset.pattern.permute.xlu0 0
    %51 = vperm.xlu0 %50, %v36
    %v52 = vpop.permute.xlu0 %51
    %55 = vset.pattern.permute.xlu0 0
    %56 = vperm.xlu0 %55, %v37
    %v57 = vpop.permute.xlu0 %56
    %60 = vset.pattern.permute.xlu0 0
    %61 = vperm.xlu0 %60, %v38
    %v62 = vpop.permute.xlu0 %61
    %65 = vset.pattern.permute.xlu0 0
    %66 = vperm.xlu0 %65, %v39
    %v67 = vpop.permute.xlu0 %66
    %70 = vset.pattern.permute.xlu0 0
    %71 = vperm.xlu0 %70, %v40
    %v72 = vpop.permute.xlu0 %71
    %75 = vset.pattern.permute.xlu0 0
    %76 = vperm.xlu0 %75, %v41
    %v77 = vpop.permute.xlu0 %76
    %80 = vset.pattern.permute.xlu0 0
    %81 = vperm.xlu0 %80, %v42
    %v82 = vpop.permute.xlu0 %81
    %85 = vset.pattern.permute.xlu0 0
    %86 = vperm.xlu0 %85, %v43
    %v87 = vpop.permute.xlu0 %86
    %90 = vset.pattern.permute.xlu0 0
    %91 = vperm.xlu0 %90, %v44
    %v92 = vpop.permute.xlu0 %91
    %95 = vset.pattern.permute.xlu0 0
    %96 = vperm.xlu0 %95, %v45
    %v97 = vpop.permute.xlu0 %96
    %100 = vset.pattern.permute.xlu0 0
    %101 = vperm.xlu0 %100, %v46
    %v102 = vpop.permute.xlu0 %101
    %105 = vset.pattern.permute.xlu0 0
    %106 = vperm.xlu0 %105, %v47
    %v107 = vpop.permute.xlu0 %106
    %110 = vset.pattern.permute.xlu0 0
    %111 = vperm.xlu0 %110, %v48
    %v112 = vpop.permute.xlu0 %111
    %vm114 = vcmask 48128
    %v116 = vsel %vm114, %v23, 0
    %v119 = vsel %vm114, %v24, 0
    %v122 = vsel %vm114, %v25, 0
    %v125 = vsel %vm114, %v26, 0
    %v128 = vsel %vm114, %v27, 0
    %v131 = vsel %vm114, %v28, 0
    %v134 = vsel %vm114, %v29, 0
    %v137 = vsel %vm114, %v30, 0
    %v140 = vsel %vm114, %v31, 0
    %v143 = vsel %vm114, %v32, 0
    %v146 = vsel %vm114, %v33, 0
    %v149 = vsel %vm114, %v34, 0
    %v152 = vsel %vm114, %v35, 0
    %vm154 = vcmask 1045504
    %v156 = vsel %vm154, %v22, 0
    %158 = vmatprep.subr.mxu0 0.0
    %159 = vmatpush1.msra.mxu0 %v156
    %160 = vmatprep.subr.mxu0 0.0
    %161 = vmatpush1.msra.mxu0 0.0
    %162 = vmatprep.subr.mxu0 0.0
    %163 = vmatpush1.msra.mxu0 0.0
    %164 = vmatprep.subr.mxu0 0.0
    %165 = vmatpush1.msra.mxu0 0.0
    %166 = vmatprep.subr.mxu0 0.0
    %167 = vmatpush1.msra.mxu0 0.0
    %168 = vmatprep.subr.mxu0 0.0
    %169 = vmatpush1.msra.mxu0 0.0
    %170 = vmatprep.subr.mxu0 0.0
    %171 = vmatpush1.msra.mxu0 0.0
    %172 = vmatprep.subr.mxu0 0.0
    %173 = vmatpush1.msra.mxu0 0.0
    %174 = vmatprep.subr.mxu0 0.0
    %175 = vmatpush1.msra.mxu0 0.0
    %176 = vmatprep.subr.mxu0 0.0
    %177 = vmatpush1.msra.mxu0 0.0
    %178 = vmatprep.subr.mxu0 0.0
    %179 = vmatpush1.msra.mxu0 0.0
    %180 = vmatprep.subr.mxu0 0.0
    %181 = vmatpush1.msra.mxu0 0.0
    %182 = vmatprep.subr.mxu0 0.0
    %183 = vmatpush1.msra.mxu0 0.0
    %184 = vmatprep.subr.mxu0 0.0
    %185 = vmatpush1.msra.mxu0 0.0
    %186 = vmatprep.subr.mxu0 0.0
    %187 = vmatpush1.msra.mxu0 0.0
    %188 = vmatprep.subr.mxu0 0.0
    %189 = vmatpush1.msra.mxu0 0.0
    %190 = vmatprep.subr.mxu0 0.0
    %191 = vmatpush1.msra.mxu0 0.0
    %192 = vmatprep.subr.mxu0 0.0
    %193 = vmatpush1.msra.mxu0 0.0
    %194 = vmatprep.subr.mxu0 0.0
    %195 = vmatpush1.msra.mxu0 0.0
    %196 = vmatprep.subr.mxu0 0.0
    %197 = vmatpush1.msra.mxu0 0.0
    %198 = vmatprep.subr.mxu0 0.0
    %199 = vmatpush1.msra.mxu0 0.0
    %200 = vmatprep.subr.mxu0 0.0
    %201 = vmatpush1.msra.mxu0 0.0
    %202 = vmatprep.subr.mxu0 0.0
    %203 = vmatpush1.msra.mxu0 0.0
    %204 = vmatprep.subr.mxu0 0.0
    %205 = vmatpush1.msra.mxu0 0.0
    %206 = vmatprep.subr.mxu0 0.0
    %207 = vmatpush1.msra.mxu0 0.0
    %208 = vmatprep.subr.mxu0 0.0
    %209 = vmatpush1.msra.mxu0 0.0
    %210 = vmatprep.subr.mxu0 0.0
    %211 = vmatpush1.msra.mxu0 0.0
    %212 = vmatprep.subr.mxu0 0.0
    %213 = vmatpush1.msra.mxu0 0.0
    %214 = vmatprep.subr.mxu0 0.0
    %215 = vmatpush1.msra.mxu0 0.0
    %216 = vmatprep.subr.mxu0 0.0
    %217 = vmatpush1.msra.mxu0 0.0
    %218 = vmatprep.subr.mxu0 0.0
    %219 = vmatpush1.msra.mxu0 0.0
    %220 = vmatprep.subr.mxu0 0.0
    %221 = vmatpush1.msra.mxu0 0.0
    %222 = vmatprep.mubr.f32.mxu0 0.0
    %223 = vmatmul.mubr.f32.gmra.mrb[0].mxu0 %v116
    %v224 = vpop.f32.mrb[0].mxu0
    %v225 = vadd.f32 %v52, %v224
    %v226 = vpop.f32.mrb[0].mxu0
    %227 = vmatprep.mubr.f32.mxu0 0.0
    %228 = vmatmul.mubr.f32.gmra.mrb[0].mxu0 %v119
    %v229 = vpop.f32.mrb[0].mxu0
    %v230 = vadd.f32 %v57, %v229
    %v231 = vpop.f32.mrb[0].mxu0
    %232 = vmatprep.mubr.f32.mxu0 0.0
    %233 = vmatmul.mubr.f32.gmra.mrb[0].mxu0 %v122
    %v234 = vpop.f32.mrb[0].mxu0
    %v235 = vadd.f32 %v62, %v234
    %v236 = vpop.f32.mrb[0].mxu0
    %237 = vmatprep.mubr.f32.mxu0 0.0
    %238 = vmatmul.mubr.f32.gmra.mrb[0].mxu0 %v125
    %v239 = vpop.f32.mrb[0].mxu0
    %v240 = vadd.f32 %v67, %v239
    %v241 = vpop.f32.mrb[0].mxu0
    %242 = vmatprep.mubr.f32.mxu0 0.0
    %243 = vmatmul.mubr.f32.gmra.mrb[0].mxu0 %v128
    %v244 = vpop.f32.mrb[0].mxu0
    %v245 = vadd.f32 %v72, %v244
    %v246 = vpop.f32.mrb[0].mxu0
    %247 = vmatprep.mubr.f32.mxu0 0.0
    %248 = vmatmul.mubr.f32.gmra.mrb[0].mxu0 %v131
    %v249 = vpop.f32.mrb[0].mxu0
    %v250 = vadd.f32 %v77, %v249
    %v251 = vpop.f32.mrb[0].mxu0
    %252 = vmatprep.mubr.f32.mxu0 0.0
    %253 = vmatmul.mubr.f32.gmra.mrb[0].mxu0 %v134
    %v254 = vpop.f32.mrb[0].mxu0
    %v255 = vadd.f32 %v82, %v254
    %v256 = vpop.f32.mrb[0].mxu0
    %257 = vmatprep.mubr.f32.mxu0 0.0
    %258 = vmatmul.mubr.f32.gmra.mrb[0].mxu0 %v137
    %v259 = vpop.f32.mrb[0].mxu0
    %v260 = vadd.f32 %v87, %v259
    %v261 = vpop.f32.mrb[0].mxu0
    %262 = vmatprep.mubr.f32.mxu0 0.0
    %263 = vmatmul.mubr.f32.gmra.mrb[0].mxu0 %v140
    %v264 = vpop.f32.mrb[0].mxu0
    %v265 = vadd.f32 %v92, %v264
    %v266 = vpop.f32.mrb[0].mxu0
    %267 = vmatprep.mubr.f32.mxu0 0.0
    %268 = vmatmul.mubr.f32.gmra.mrb[0].mxu0 %v143
    %v269 = vpop.f32.mrb[0].mxu0
    %v270 = vadd.f32 %v97, %v269
    %v271 = vpop.f32.mrb[0].mxu0
    %272 = vmatprep.mubr.f32.mxu0 0.0
    %273 = vmatmul.mubr.f32.gmra.mrb[0].mxu0 %v146
    %v274 = vpop.f32.mrb[0].mxu0
    %v275 = vadd.f32 %v102, %v274
    %v276 = vpop.f32.mrb[0].mxu0
    %277 = vmatprep.mubr.f32.mxu0 0.0
    %278 = vmatmul.mubr.f32.gmra.mrb[0].mxu0 %v149
    %v279 = vpop.f32.mrb[0].mxu0
    %v280 = vadd.f32 %v107, %v279
    %v281 = vpop.f32.mrb[0].mxu0
    %282 = vmatprep.mubr.f32.mxu0 0.0
    %283 = vmatmul.mubr.f32.gmra.mrb[0].mxu0 %v152
    %v284 = vpop.f32.mrb[0].mxu0
    %v285 = vadd.f32 %v112, %v284
    %v286 = vpop.f32.mrb[0].mxu0
    %287 = vdwg.mxu0
    %v288 = vmax.f32 %v225, 0.0
    %v289 = vmax.f32 %v230, 0.0
    %v290 = vmax.f32 %v235, 0.0
    %v291 = vmax.f32 %v240, 0.0
    %v292 = vmax.f32 %v245, 0.0
    %v293 = vmax.f32 %v250, 0.0
    %v294 = vmax.f32 %v255, 0.0
    %v295 = vmax.f32 %v260, 0.0
    %v296 = vmax.f32 %v265, 0.0
    %v297 = vmax.f32 %v270, 0.0
    %v298 = vmax.f32 %v275, 0.0
    %v299 = vmax.f32 %v280, 0.0
    %v300 = vmax.f32 %v285, 0.0
    %v301 = vld [vmem:[%s3] sm:$0x1]
    %s302 = sld [smem:[#allocation2]]
    %v303 = vstv %s302
    %vm304 = vcmask 818176
    %v306 = vsel %vm304, %v301, 0
    %vm308 = vcmask 1043456
    %v310 = vsel %vm308, %v300, 0
    %312 = vmatprep.subr.mxu0 0.0
    %313 = vmatpush1.msra.mxu0 %v288
    %314 = vmatprep.subr.mxu0 0.0
    %315 = vmatpush1.msra.mxu0 %v289
    %316 = vmatprep.subr.mxu0 0.0
    %317 = vmatpush1.msra.mxu0 %v290
    %318 = vmatprep.subr.mxu0 0.0
    %319 = vmatpush1.msra.mxu0 %v291
    %320 = vmatprep.subr.mxu0 0.0
    %321 = vmatpush1.msra.mxu0 %v292
    %322 = vmatprep.subr.mxu0 0.0
    %323 = vmatpush1.msra.mxu0 %v293
    %324 = vmatprep.subr.mxu0 0.0
    %325 = vmatpush1.msra.mxu0 %v294
    %326 = vmatprep.subr.mxu0 0.0
    %327 = vmatpush1.msra.mxu0 %v295
    %328 = vmatprep.subr.mxu0 0.0
    %329 = vmatpush1.msra.mxu0 %v296
    %330 = vmatprep.subr.mxu0 0.0
    %331 = vmatpush1.msra.mxu0 %v297
    %332 = vmatprep.subr.mxu0 0.0
    %333 = vmatpush1.msra.mxu0 %v298
    %334 = vmatprep.subr.mxu0 0.0
    %335 = vmatpush1.msra.mxu0 %v299
    %336 = vmatprep.subr.mxu0 0.0
    %337 = vmatpush1.msra.mxu0 %v310
    %338 = vmatprep.subr.mxu0 0.0
    %339 = vmatpush1.msra.mxu0 0.0
    %340 = vmatprep.subr.mxu0 0.0
    %341 = vmatpush1.msra.mxu0 0.0
    %342 = vmatprep.subr.mxu0 0.0
    %343 = vmatpush1.msra.mxu0 0.0
    %344 = vmatprep.subr.mxu0 0.0
    %345 = vmatpush1.msra.mxu0 0.0
    %346 = vmatprep.subr.mxu0 0.0
    %347 = vmatpush1.msra.mxu0 0.0
    %348 = vmatprep.subr.mxu0 0.0
    %349 = vmatpush1.msra.mxu0 0.0
    %350 = vmatprep.subr.mxu0 0.0
    %351 = vmatpush1.msra.mxu0 0.0
    %352 = vmatprep.subr.mxu0 0.0
    %353 = vmatpush1.msra.mxu0 0.0
    %354 = vmatprep.subr.mxu0 0.0
    %355 = vmatpush1.msra.mxu0 0.0
    %356 = vmatprep.subr.mxu0 0.0
    %357 = vmatpush1.msra.mxu0 0.0
    %358 = vmatprep.subr.mxu0 0.0
    %359 = vmatpush1.msra.mxu0 0.0
    %360 = vmatprep.subr.mxu0 0.0
    %361 = vmatpush1.msra.mxu0 0.0
    %362 = vmatprep.subr.mxu0 0.0
    %363 = vmatpush1.msra.mxu0 0.0
    %364 = vmatprep.subr.mxu0 0.0
    %365 = vmatpush1.msra.mxu0 0.0
    %366 = vmatprep.subr.mxu0 0.0
    %367 = vmatpush1.msra.mxu0 0.0
    %368 = vmatprep.subr.mxu0 0.0
    %369 = vmatpush1.msra.mxu0 0.0
    %370 = vmatprep.subr.mxu0 0.0
    %371 = vmatpush1.msra.mxu0 0.0
    %372 = vmatprep.subr.mxu0 0.0
    %373 = vmatpush1.msra.mxu0 0.0
    %374 = vmatprep.subr.mxu0 0.0
    %375 = vmatpush1.msra.mxu0 0.0
    %376 = vmatprep.mubr.f32.mxu0 0.0
    %377 = vmatmul.mubr.f32.gmra.mrb[0].mxu0 %v306
    %v378 = vpop.f32.mrb[0].mxu0
    %v379 = vadd.f32 %v303, %v378
    %v380 = vpop.f32.mrb[0].mxu0
    %381 = vdwg.mxu0
    %382 = vst [vmem:[#allocation3] sm:$0x1] %v379
    // Predicated region
    $region22: #{tpu_custom_call.1} parent=1 // pred_check
      _
    $region23: #{tpu_custom_call.1} parent=1 // pred_check_branch
      %384 = sbr.rel (0) target = $region25
    $region24: #{tpu_custom_call.1} parent=1 // pred_region
      %s386 = ssub.s32 16, 16
      %387 = vsyncadd [#allocation4], %s386
      %s389 = sshll.u32 [#allocation3], 4
      %s390 = int_to_ptr.vmem [resolvable:$true] %s389
      %392 = dma.vmem_to_hbm [thread:$0]  %s390, 16, %s5, [#allocation4]
    $region25: #{tpu_custom_call.1} parent=1 // pred_fallthru
      _
    // Predicated region
    $region26: #{tpu_custom_call.1} parent=1 // pred_check
      _
    $region27: #{tpu_custom_call.1} parent=1 // pred_check_branch
      %394 = sbr.rel (0) target = $region29
    $region28: #{tpu_custom_call.1} parent=1 // pred_region
      %395 = dma.done [#allocation4], 16
    $region29: #{tpu_custom_call.1} parent=1 // pred_fallthru
      _
    %396 = vsyncpa [#allocation4], 1

</llo_original>
